<compile_context>
chip_gen: v7x
topology: tpu7x:2x2x1
jax: 0.10.0
libtpu: 0.0.40
codegen_flags: <defaults>
</compile_context>

<pallas_src>
import functools

import jax
import jax.numpy as jnp
from jax import lax
from jax.experimental import pallas as pl
from jax.experimental.pallas import tpu as pltpu


# --------------------------------------------------------------------------- #
# helpers
# --------------------------------------------------------------------------- #
def _pad128(n):
    return ((int(n) + 127) // 128) * 128


def _round8(n):
    return max(8, ((int(n) + 7) // 8) * 8)


def _device_kind():
    try:
        return jax.devices()[0].device_kind.lower()
    except Exception:
        return ""


def _default_block_rows(kind):
    # Sized so the per-step streamed payload amortizes the ~0.35us grid-step
    # overhead at each generation's HBM bandwidth.
    if "v5" in kind:
        return 2048
    if "v6" in kind:
        return 4096
    if "7" in kind:            # v7x
        return 8192
    return 4096


# --------------------------------------------------------------------------- #
# kernels
# --------------------------------------------------------------------------- #
def _gamma_small_kernel(x_ref, y_ref, wsum_ref, s1_ref, s2_ref):
    """Gridless path: whole problem resident in VMEM. Emits S1 = sum r, S2 = sum r^2."""
    n_obs = y_ref.shape[0]
    w = wsum_ref[...]                                               # (1, n_x)
    xw = jnp.sum(x_ref[...] * w, axis=1, keepdims=True)             # (n_obs+1, 1)
    ys = jnp.sum(y_ref[...], axis=1, keepdims=True)                 # (n_obs, 1)
    r = ys - xw[:n_obs, :]          # b_sum shift dropped: variance is shift-invariant
    s1_ref[...] = jnp.sum(r, axis=0, keepdims=True)
    s2_ref[...] = jnp.sum(r * r, axis=0, keepdims=True)


def _gamma_tiled_kernel(x_ref, y_ref, wsum_ref, s1_ref, s2_ref, *,
                        tiles_per_split, n_obs, n_full):
    """Streaming path: grid = (splits, tiles). Per-split S1/S2 accumulate directly
    into the resident output blocks (same block index across the arbitrary axis)."""
    c = pl.program_id(0)                       # split (TensorCore shard on v7x)
    i = pl.program_id(1)                       # tile within split
    tm = y_ref.shape[0]

    @pl.when(i == 0)
    def _init():
        s1_ref[...] = jnp.zeros_like(s1_ref)
        s2_ref[...] = jnp.zeros_like(s2_ref)

    w = wsum_ref[...]                                               # (1, n_x)
    r = (jnp.sum(y_ref[...], axis=1, keepdims=True)
         - jnp.sum(x_ref[...] * w, axis=1, keepdims=True))          # (tm, 1)

    g = c * tiles_per_split + i                # global tile index (unclamped)

    # Full tiles skip the mask entirely; only the partial/redundant tail tiles
    # pay for the iota + compare + select.
    @pl.when(g < n_full)
    def _full_tile():
        s1_ref[...] += jnp.sum(r)
        s2_ref[...] += jnp.sum(r * r)

    @pl.when(g >= n_full)
    def _edge_tile():
        row = g * tm + lax.broadcasted_iota(jnp.int32, (tm, 1), 0)
        rm = jnp.where(row < n_obs, r, 0.0)
        s1_ref[...] += jnp.sum(rm)
        s2_ref[...] += jnp.sum(rm * rm)


# --------------------------------------------------------------------------- #
# wrapper
# --------------------------------------------------------------------------- #
def gamma_range_forward(X, Y, W, b, *, block_rows=None, splits=None):
    """X: (n_obs+1, n_x), Y: (n_obs, n_y), W: (n_y, n_x) nn.Linear layout, b: (n_y,)."""
    T, n_x = X.shape
    n_obs, n_y = Y.shape
    if T != n_obs + 1:
        raise ValueError("X must have n_obs + 1 rows")
    if n_obs < 2:
        raise ValueError("sample covariance (ddof=1) requires n_obs >= 2")

    X = jnp.asarray(X, jnp.float32)
    Y = jnp.asarray(Y, jnp.float32)
    W = jnp.asarray(W, jnp.float32)
    b = jnp.asarray(b, jnp.float32).reshape(n_y)

    # Fold the frozen linear layer: only Y_hat row-sums matter with uniform z.
    w_sum = jnp.sum(W, axis=0)                       # (n_x,)
    b_sum = jnp.sum(b)                               # ()
    w_sum_row = w_sum.reshape(1, n_x)

    # denom = |Y_hat[-1] @ z|  (tiny O(n_x) op; plain JAX epilogue)
    denom = jnp.abs(jnp.dot(X[n_obs], w_sum) + b_sum) / n_y

    kind = _device_kind()
    req_rows = _default_block_rows(kind) if block_rows is None else int(block_rows)
    req_rows = _round8(req_rows)

    flops = 3 * n_obs * (n_x + n_y)
    bytes_accessed = 4 * ((n_obs + 1) * n_x + n_obs * n_y + n_x)
    cost = pl.CostEstimate(flops=flops, transcendentals=0,
                           bytes_accessed=bytes_accessed)

    def _finish(s1, s2):
        quad = (s2 - s1 * s1 / n_obs) / ((n_obs - 1) * n_y * n_y)
        return quad / denom

    # ---------------- small path: one shot, no grid ---------------- #
    if n_obs <= min(req_rows, 2048):
        s1, s2 = pl.pallas_call(
            _gamma_small_kernel,
            out_shape=(jax.ShapeDtypeStruct((1, 1), jnp.float32),
                       jax.ShapeDtypeStruct((1, 1), jnp.float32)),
            cost_estimate=cost,
        )(X, Y, w_sum_row)
        return _finish(s1[0, 0], s2[0, 0])

    # ---------------- streaming path ---------------- #
    pad_lanes = _pad128(n_x) + _pad128(n_y)          # lane-padded VMEM cols per row
    nbuf = 3 if 4 * req_rows * pad_lanes < (1 << 20) else 2   # deeper buffering for tiny tiles

    # VMEM budget: streamed buffers (lane-padded) + ~6 (tm,1) column temporaries
    # + headroom; cap lower on v7x (64 MiB physical per TC).
    cap = (30 << 20) if "7" in kind else (48 << 20)
    per_row_bytes = nbuf * 4 * pad_lanes + 6 * 4 * 128
    tm = min(req_rows, _round8(max(8, (cap - (2 << 20)) // per_row_bytes)))
    tm = min(tm, _round8(pl.cdiv(n_obs, 2)))         # >= 2 tiles; block never exceeds array
    num_tiles = pl.cdiv(n_obs, tm)

    if splits is None:
        splits = 2 if ("7" in kind and num_tiles >= 2) else 1   # 2 TCs on v7x
    splits = max(1, min(int(splits), num_tiles))
    tiles_per_split = pl.cdiv(num_tiles, splits)
    n_full = n_obs // tm                             # tiles needing no row mask

    # Clamp redundant trailing tiles to the last valid block (their rows are
    # >= n_obs, so the in-kernel mask zeroes their contribution).
    def _stream_map(c, i):
        return (jnp.minimum(c * tiles_per_split + i, num_tiles - 1), 0)

    def _stream_spec(shape):
        if nbuf > 2:
            try:
                return pl.BlockSpec(shape, _stream_map, pipeline_mode=pl.Buffered(nbuf))
            except Exception:
                pass
        return pl.BlockSpec(shape, _stream_map)

    vmem_limit = int(min(cap, per_row_bytes * tm + (2 << 20)))

    kernel = functools.partial(_gamma_tiled_kernel,
                               tiles_per_split=tiles_per_split,
                               n_obs=n_obs, n_full=n_full)
    s1_parts, s2_parts = pl.pallas_call(
        kernel,
        out_shape=(jax.ShapeDtypeStruct((splits, 1, 128), jnp.float32),
                   jax.ShapeDtypeStruct((splits, 1, 128), jnp.float32)),
        grid=(splits, tiles_per_split),
        in_specs=[
            _stream_spec((tm, n_x)),                        # X tiles   (streamed)
            _stream_spec((tm, n_y)),                        # Y tiles   (streamed)
            pl.BlockSpec((1, n_x), lambda c, i: (0, 0)),    # w_sum     (resident)
        ],
        out_specs=(pl.BlockSpec((1, 1, 128), lambda c, i: (c, 0, 0)),
                   pl.BlockSpec((1, 1, 128), lambda c, i: (c, 0, 0))),
        compiler_params=pltpu.CompilerParams(
            dimension_semantics=("parallel", "arbitrary"),
            vmem_limit_bytes=vmem_limit),
        cost_estimate=cost,
    )(X, Y, w_sum_row)

    s1 = jnp.sum(s1_parts[:, 0, 0])
    s2 = jnp.sum(s2_parts[:, 0, 0])
    return _finish(s1, s2)


# --------------------------------------------------------------------------- #
# pure-JAX reference (mirrors the PyTorch forward, f32 HIGHEST precision)
# --------------------------------------------------------------------------- #
def gamma_range_reference(X, Y, W, b):
    n_obs, n_y = Y.shape
    Y_hat = jnp.dot(X, W.T, precision=lax.Precision.HIGHEST) + b
    ep = Y - Y_hat[:-1]
    epc = ep - ep.mean(axis=0, keepdims=True)
    cov_ep = jnp.dot(epc.T, epc, precision=lax.Precision.HIGHEST) / (n_obs - 1)
    z = jnp.ones((n_y,), X.dtype) / n_y
    return z @ cov_ep @ z / jnp.abs(Y_hat[-1] @ z)


if __name__ == "__main__":
    # --- small case (module-scale shapes; exercises the gridless path) ---
    n_x, n_y, n_obs = 8, 8, 16
    kX, kY, kW, kb = jax.random.split(jax.random.PRNGKey(0), 4)
    X = jax.random.normal(kX, (n_obs + 1, n_x), dtype=jnp.float32)
    Y = jax.random.normal(kY, (n_obs, n_y), dtype=jnp.float32) * 0.1
    W = jax.random.normal(kW, (n_y, n_x), dtype=jnp.float32) * 0.05   # frozen pred_layer.weight
    b = jax.random.normal(kb, (n_y,), dtype=jnp.float32) * 0.01       # frozen pred_layer.bias

    gamma = gamma_range_forward(X, Y, W, b)
    jax.block_until_ready(gamma)
    ref = gamma_range_reference(X, Y, W, b)
    assert jnp.allclose(gamma, ref, rtol=1e-3, atol=1e-6), (gamma, ref)

    # --- larger case (streaming path + partial-tile mask) ---
    n_x2, n_y2, n_obs2 = 24, 16, 1000
    k1, k2, k3, k4 = jax.random.split(jax.random.PRNGKey(1), 4)
    X2 = jax.random.normal(k1, (n_obs2 + 1, n_x2), dtype=jnp.float32)
    Y2 = jax.random.normal(k2, (n_obs2, n_y2), dtype=jnp.float32) * 0.1
    W2 = jax.random.normal(k3, (n_y2, n_x2), dtype=jnp.float32) * 0.05
    b2 = 0.25 + jax.random.normal(k4, (n_y2,), dtype=jnp.float32) * 0.01

    ref2 = gamma_range_reference(X2, Y2, W2, b2)

    gamma2 = gamma_range_forward(X2, Y2, W2, b2, block_rows=256)
    jax.block_until_ready(gamma2)
    assert jnp.allclose(gamma2, ref2, rtol=1e-3, atol=1e-6), (gamma2, ref2)

    # --- same data, forced 2-way core split with an odd tile count:
    #     exercises per-split partials, the partial-tile mask, and the
    #     clamped redundant tile ---
    gamma3 = gamma_range_forward(X2, Y2, W2, b2, block_rows=384, splits=2)
    jax.block_until_ready(gamma3)
    assert jnp.allclose(gamma3, ref2, rtol=1e-3, atol=1e-6), (gamma3, ref2)

    print("KERNEL_OK")
</pallas_src>

<mosaic_0001>
module attributes {stable_mosaic.version = 11 : i64} {
  func.func @_gamma_small_kernel(%arg0: memref<17x8xf32, #tpu.memory_space<vmem>>, %arg1: memref<16x8xf32, #tpu.memory_space<vmem>>, %arg2: memref<1x8xf32, #tpu.memory_space<vmem>>, %arg3: memref<1x1xf32, #tpu.memory_space<vmem>>, %arg4: memref<1x1xf32, #tpu.memory_space<vmem>>) attributes {dimension_semantics = [], scalar_prefetch = 0 : i64, scratch_operands = 0 : i64, tpu.core_type = #tpu.core_type<tc>} {
    %c0 = arith.constant 0 : index
    %c0_0 = arith.constant 0 : index
    %0 = vector.load %arg2[%c0, %c0_0] : memref<1x8xf32, #tpu.memory_space<vmem>>, vector<1x8xf32>
    %c0_1 = arith.constant 0 : index
    %c0_2 = arith.constant 0 : index
    %1 = vector.load %arg0[%c0_1, %c0_2] : memref<17x8xf32, #tpu.memory_space<vmem>>, vector<17x8xf32>
    %2 = vector.broadcast %0 : vector<1x8xf32> to vector<17x8xf32>
    %3 = arith.mulf %1, %2 : vector<17x8xf32>
    %cst = arith.constant dense<0.000000e+00> : vector<17xf32>
    %4 = vector.multi_reduction <add>, %3, %cst [1] : vector<17x8xf32> to vector<17xf32>
    %5 = vector.shape_cast %4 : vector<17xf32> to vector<17x1xf32>
    %c0_3 = arith.constant 0 : index
    %c0_4 = arith.constant 0 : index
    %6 = vector.load %arg1[%c0_3, %c0_4] : memref<16x8xf32, #tpu.memory_space<vmem>>, vector<16x8xf32>
    %cst_5 = arith.constant dense<0.000000e+00> : vector<16xf32>
    %7 = vector.multi_reduction <add>, %6, %cst_5 [1] : vector<16x8xf32> to vector<16xf32>
    %8 = vector.shape_cast %7 : vector<16xf32> to vector<16x1xf32>
    %9 = vector.extract_strided_slice %5 {offsets = [0, 0], sizes = [16, 1], strides = [1, 1]} : vector<17x1xf32> to vector<16x1xf32>
    %10 = arith.subf %8, %9 : vector<16x1xf32>
    %cst_6 = arith.constant dense<0.000000e+00> : vector<1xf32>
    %11 = vector.multi_reduction <add>, %10, %cst_6 [0] : vector<16x1xf32> to vector<1xf32>
    %12 = vector.shape_cast %11 : vector<1xf32> to vector<1x1xf32>
    %c0_7 = arith.constant 0 : index
    %c0_8 = arith.constant 0 : index
    %13 = vector.load %arg3[%c0_7, %c0_8] : memref<1x1xf32, #tpu.memory_space<vmem>>, vector<1x1xf32>
    tpu.vector_store %arg3[%c0_7, %c0_8], %12 {strides = array<i32>} : memref<1x1xf32, #tpu.memory_space<vmem>>, vector<1x1xf32>,
    %14 = arith.mulf %10, %10 : vector<16x1xf32>
    %cst_9 = arith.constant dense<0.000000e+00> : vector<1xf32>
    %15 = vector.multi_reduction <add>, %14, %cst_9 [0] : vector<16x1xf32> to vector<1xf32>
    %16 = vector.shape_cast %15 : vector<1xf32> to vector<1x1xf32>
    %c0_10 = arith.constant 0 : index
    %c0_11 = arith.constant 0 : index
    %17 = vector.load %arg4[%c0_10, %c0_11] : memref<1x1xf32, #tpu.memory_space<vmem>>, vector<1x1xf32>
    tpu.vector_store %arg4[%c0_10, %c0_11], %16 {strides = array<i32>} : memref<1x1xf32, #tpu.memory_space<vmem>>, vector<1x1xf32>,
    return
  }
}

</mosaic_0001>

<llo_original>
// kernel: tpu_custom_call.1
$region0: #{tpu_custom_call.1}
  #allocation0 [shape = 'u32[]', space=smem, size = 0x4, offset = 0x4, fixed_abs, tag = 'smem constant byte address 0x4 - core index']
  #allocation1 [shape = 'u32[144,128]{1,0:T(1,128)}', space=vmem, size = 0x12000, scoped, tag = 'internal scratch']
  %s0 = inlined_call_operand.vmem [shape: f32[17,8], index: 0, kind: input, shape index: {}]
  %s1 = inlined_call_operand.vmem [shape: f32[16,8], index: 1, kind: input, shape index: {}]
  %s2 = inlined_call_operand.vmem [shape: f32[1,8], index: 2, kind: input, shape index: {}]
  %s3 = inlined_call_operand.hbm [shape: f32[1,1], index: 3, kind: output, shape index: {0}]
  %s4 = inlined_call_operand.hbm [shape: f32[1,1], index: 4, kind: output, shape index: {1}]
  %5 = xla_tuple %s3, %s4
  %s6 = sld [smem:[#allocation0]]
  $region30: #{tpu_custom_call.1} parent=0
    _
  %s8 = ssub.s32 1, %s6
  %s9 = scalar_select 0, %s8, %s6
  $region1: #{tpu_custom_call.1} parent=0
    #allocation2 [shape = 'u8[512]{0}', space=vmem, size = 0x400, scoped, tag = 'output window, operand 0, single buffered']
    #allocation3 [shape = 's32[1]{0}', space=sflag, size = 0x4, scoped, tag = 'scoped memory for tpu_custom_call.1']
    #allocation4 [shape = 'u8[512]{0}', space=vmem, size = 0x400, scoped, tag = 'output window, operand 1, single buffered']
    #allocation5 [shape = 's32[1]{0}', space=sflag, size = 0x4, scoped, tag = 'scoped memory for tpu_custom_call.1']
    %10 = vsyncpa [#allocation3], 0
    %11 = vsyncpa [#allocation5], 0
    // Predicated region
    $region2: #{tpu_custom_call.1} parent=1 // pred_check
      _
    $region3: #{tpu_custom_call.1} parent=1 // pred_check_branch
      %13 = sbr.rel (0) target = $region5
    $region4: #{tpu_custom_call.1} parent=1 // pred_region
      _
    $region5: #{tpu_custom_call.1} parent=1 // pred_fallthru
      _
    // Predicated region
    $region6: #{tpu_custom_call.1} parent=1 // pred_check
      _
    $region7: #{tpu_custom_call.1} parent=1 // pred_check_branch
      %15 = sbr.rel (0) target = $region9
    $region8: #{tpu_custom_call.1} parent=1 // pred_region
      _
    $region9: #{tpu_custom_call.1} parent=1 // pred_fallthru
      _
    // Predicated region
    $region10: #{tpu_custom_call.1} parent=1 // pred_check
      _
    $region11: #{tpu_custom_call.1} parent=1 // pred_check_branch
      %17 = sbr.rel (0) target = $region13
    $region12: #{tpu_custom_call.1} parent=1 // pred_region
      _
    $region13: #{tpu_custom_call.1} parent=1 // pred_fallthru
      _
    %v18 = vld [vmem:[%s2] sm:$0x1]
    %v19 = vld [vmem:[%s0] sm:$0xff]
    %v20 = vld [vmem:[%s0 + $0x8] sm:$0xff]
    %v22 = vlaneseq
    %v23 = vshrl.u32 %v22, 7
    %v24 = vsub.s32 0, %v23
    %v25 = vrot.slane %v18, %v24
    %v27 = vmul.f32 %v19, %v25
    %v28 = vmul.f32 %v20, %v25
    %vm29 = vcmask 64512
    %v30 = vsel %vm29, %v27, 0.0
    %31 = vadd.xlane.f32.xlu0 %v30
    %v32 = vpop.xlane.xlu0 %31
    %v33 = vsel %vm29, %v28, 0.0
    %34 = vadd.xlane.f32.xlu0 %v33
    %v35 = vpop.xlane.xlu0 %34
    %v36 = vld [vmem:[%s1] sm:$0xff]
    %v37 = vld [vmem:[%s1 + $0x8] sm:$0xff]
    %v38 = vsel %vm29, %v36, 0.0
    %39 = vadd.xlane.f32.xlu0 %v38
    %v40 = vpop.xlane.xlu0 %39
    %v41 = vsel %vm29, %v37, 0.0
    %42 = vadd.xlane.f32.xlu0 %v41
    %v43 = vpop.xlane.xlu0 %42
    %v44 = vsub.f32 %v40, %v32
    %v45 = vsub.f32 %v43, %v35
    %v46 = vadd.f32 %v44, %v45
    %v47 = vrot.slane %v46, 4
    %v48 = vadd.f32 %v46, %v47
    %v49 = vrot.slane %v48, 2
    %v50 = vadd.f32 %v48, %v49
    %v51 = vrot.slane %v50, 1
    %v52 = vadd.f32 %v50, %v51
    %vm53 = vcmask 0
    %54 = vst.msk [vmem:[#allocation2] sm:$0x1] %vm53, %v52
    %v55 = vmul.f32 %v44, %v44
    %v56 = vmul.f32 %v45, %v45
    %v57 = vadd.f32 %v55, %v56
    %v58 = vrot.slane %v57, 4
    %v59 = vadd.f32 %v57, %v58
    %v60 = vrot.slane %v59, 2
    %v61 = vadd.f32 %v59, %v60
    %v62 = vrot.slane %v61, 1
    %v63 = vadd.f32 %v61, %v62
    %64 = vst.msk [vmem:[#allocation4] sm:$0x1] %vm53, %v63
    // Predicated region
    $region14: #{tpu_custom_call.1} parent=1 // pred_check
      _
    $region15: #{tpu_custom_call.1} parent=1 // pred_check_branch
      %66 = sbr.rel (0) target = $region17
    $region16: #{tpu_custom_call.1} parent=1 // pred_region
      %s68 = ssub.s32 16, 16
      %69 = vsyncadd [#allocation3], %s68
      %s71 = sshll.u32 [#allocation2], 4
      %s72 = int_to_ptr.vmem [resolvable:$true] %s71
      %74 = dma.vmem_to_hbm [thread:$0]  %s72, 16, %s3, [#allocation3]
    $region17: #{tpu_custom_call.1} parent=1 // pred_fallthru
      _
    // Predicated region
    $region18: #{tpu_custom_call.1} parent=1 // pred_check
      _
    $region19: #{tpu_custom_call.1} parent=1 // pred_check_branch
      %76 = sbr.rel (0) target = $region21
    $region20: #{tpu_custom_call.1} parent=1 // pred_region
      %s78 = ssub.s32 16, 16
      %79 = vsyncadd [#allocation5], %s78
      %s81 = sshll.u32 [#allocation4], 4
      %s82 = int_to_ptr.vmem [resolvable:$true] %s81
      %84 = dma.vmem_to_hbm [thread:$0]  %s82, 16, %s4, [#allocation5]
    $region21: #{tpu_custom_call.1} parent=1 // pred_fallthru
      _
    // Predicated region
    $region22: #{tpu_custom_call.1} parent=1 // pred_check
      _
    $region23: #{tpu_custom_call.1} parent=1 // pred_check_branch
      %86 = sbr.rel (0) target = $region25
    $region24: #{tpu_custom_call.1} parent=1 // pred_region
      %87 = dma.done [#allocation3], 16
    $region25: #{tpu_custom_call.1} parent=1 // pred_fallthru
      _
    // Predicated region
    $region26: #{tpu_custom_call.1} parent=1 // pred_check
      _
    $region27: #{tpu_custom_call.1} parent=1 // pred_check_branch
      %89 = sbr.rel (0) target = $region29
    $region28: #{tpu_custom_call.1} parent=1 // pred_region
      %90 = dma.done [#allocation5], 16
    $region29: #{tpu_custom_call.1} parent=1 // pred_fallthru
      _
    %91 = vsyncpa [#allocation3], 1
    %92 = vsyncpa [#allocation5], 1

</llo_original>
